<compile_context>
chip_gen: v5e
topology: v5e:2x2
jax: 0.10.0
libtpu: 0.0.40
codegen_flags: <defaults>
</compile_context>

<pallas_src>
import functools

import jax
import jax.numpy as jnp
from jax.experimental import pallas as pl
from jax.experimental.pallas import tpu as pltpu


def _leaky_relu(x, negative_slope=0.01):
    # PyTorch F.leaky_relu default negative_slope = 0.01
    return jnp.where(x > 0, x, negative_slope * x)


def _round_up(n, m):
    return (n + m - 1) // m * m


def dqn_kernel(x_ref,
               w1_ref, b1_ref,
               w2_ref, b2_ref,
               w3_ref, b3_ref,
               w4_ref, b4_ref,
               o_ref, *, chunk):
    # x_ref: (8, tb) bf16, batch on the 128-wide lane axis.
    # weights: (out, in) bf16; biases: (out, 1) f32; o_ref: (8, tb) f32
    # (output rows 4..7 are zero-padding for full-sublane stores).
    tb = x_ref.shape[1]
    nc = tb // chunk

    # Hoist the tiny weight/bias loads out of the chunk loop (held in ~26 vregs).
    w1, b1 = w1_ref[...], b1_ref[...]
    w2, b2 = w2_ref[...], b2_ref[...]
    w3, b3 = w3_ref[...], b3_ref[...]
    w4, b4 = w4_ref[...], b4_ref[...]

    # Fully-unrolled chunk loop with static, lane-aligned slices: all per-chunk
    # intermediates (~30 vregs at chunk=256) stay register-resident, so no
    # VMEM spill traffic on the vld/vst slots.
    for c in range(nc):
        col = c * chunk
        x = x_ref[:, pl.ds(col, chunk)]                                   # (8, C) bf16

        h = jnp.dot(w1, x, preferred_element_type=jnp.float32)           # (32, C) f32
        h = _leaky_relu(h + b1)

        h = jnp.dot(w2, h.astype(jnp.bfloat16),
                    preferred_element_type=jnp.float32)                  # (64, C)
        h = _leaky_relu(h + b2)

        h = jnp.dot(w3, h.astype(jnp.bfloat16),
                    preferred_element_type=jnp.float32)                  # (32, C)
        h = _leaky_relu(h + b3)

        out = jnp.dot(w4, h.astype(jnp.bfloat16),
                      preferred_element_type=jnp.float32)                # (8, C)
        o_ref[:, pl.ds(col, chunk)] = (out + b4).astype(o_ref.dtype)


def dqn_forward(x, params, *, tb=8192):
    """x: (B, 8) f32; params: weights (out, in) bf16, biases (out, 1) f32.
    Returns (B, 4) f32 (PyTorch DQN forward semantics)."""
    B = x.shape[0]
    Bp128 = _round_up(B, 128)
    tb = _round_up(max(tb, 128), 128)          # lane-width multiple (correctness)

    # Number of grid steps: cover the batch at the requested tile, and use >= 2
    # steps whenever the batch spans more than one 128-lane tile so the
    # "parallel" axis can shard across v7x's two TensorCores.
    n_steps = pl.cdiv(Bp128, tb)
    if Bp128 > 128:
        n_steps = max(n_steps, 2)
    tb = _round_up(pl.cdiv(Bp128, n_steps), 128)
    chunk = 128 if tb < 256 else 256
    tb = _round_up(tb, chunk)                  # inner chunk loop divides evenly
    Bp = tb * n_steps

    # Single fused wrapper pass: pad + bf16 cast + transpose -> lane-dense
    # (8, Bp) bf16 slab (batch on lanes). Padded rows are zeros; their outputs
    # are discarded below.
    xt = jnp.pad(x.astype(jnp.bfloat16), ((0, Bp - B), (0, 0))).T          # (8, Bp)

    # Zero-pad the last layer to 8 output rows -> unmasked full-sublane stores.
    w4p = jnp.zeros((8, 32), jnp.bfloat16).at[:4].set(params["w4"])
    b4p = jnp.zeros((8, 1), jnp.float32).at[:4].set(params["b4"])

    weight_args = (params["w1"], params["b1"],
                   params["w2"], params["b2"],
                   params["w3"], params["b3"],
                   w4p, b4p)
    # Constant index_map -> each weight/bias is DMA'd once and stays VMEM-resident.
    weight_specs = [pl.BlockSpec(w.shape, lambda i: (0, 0)) for w in weight_args]

    out_t = pl.pallas_call(
        functools.partial(dqn_kernel, chunk=chunk),
        out_shape=jax.ShapeDtypeStruct((8, Bp), jnp.float32),
        grid=(n_steps,),
        in_specs=[pl.BlockSpec((8, tb), lambda i: (0, i))] + weight_specs,
        out_specs=pl.BlockSpec((8, tb), lambda i: (0, i)),
        compiler_params=pltpu.CompilerParams(
            dimension_semantics=("parallel",),
            vmem_limit_bytes=32 * 1024 * 1024),
    )(xt, *weight_args)

    # (8, Bp) -> (B, 4): drop padded output rows / padded batch; the slice fuses
    # into the single output transpose pass.
    return out_t[:4, :B].T


def init_params(key):
    """PyTorch nn.Linear-style init (uniform +/- 1/sqrt(fan_in)).
    Weights stored (out_features, in_features) in bf16; biases (out, 1) f32."""
    dims = [(8, 32), (32, 64), (64, 32), (32, 4)]
    params = {}
    for i, (fin, fout) in enumerate(dims, start=1):
        key, kw, kb = jax.random.split(key, 3)
        bound = 1.0 / (fin ** 0.5)
        params[f"w{i}"] = jax.random.uniform(
            kw, (fout, fin), jnp.float32, minval=-bound, maxval=bound
        ).astype(jnp.bfloat16)
        params[f"b{i}"] = jax.random.uniform(
            kb, (fout, 1), jnp.float32, minval=-bound, maxval=bound)
    return params


def dqn_reference(x, params):
    """Pure-JAX reference with the same bf16-matmul / f32-elementwise recipe."""
    h = x.astype(jnp.float32)
    for i in (1, 2, 3):
        w, b = params[f"w{i}"], params[f"b{i}"]
        h = jnp.dot(h.astype(jnp.bfloat16), w.T,
                    preferred_element_type=jnp.float32) + b.T
        h = jnp.where(h > 0, h, 0.01 * h)
    w, b = params["w4"], params["b4"]
    return jnp.dot(h.astype(jnp.bfloat16), w.T,
                   preferred_element_type=jnp.float32) + b.T


if __name__ == "__main__":
    key = jax.random.PRNGKey(0)
    kx, kp = jax.random.split(key)
    B = 64
    x = jax.random.normal(kx, (B, 8), jnp.float32)
    params = init_params(kp)

    fwd = jax.jit(dqn_forward)          # fuse the pad/cast/transpose wrapper ops
    out = jax.block_until_ready(fwd(x, params))

    ref = dqn_reference(x, params)
    assert out.shape == (B, 4)
    assert jnp.allclose(out, ref, atol=2e-2, rtol=2e-2), "mismatch vs reference"
    print("KERNEL_OK")
</pallas_src>

<mosaic_0001>
module attributes {stable_mosaic.version = 11 : i64} {
  func.func @dqn_kernel(%arg0: i32, %arg1: memref<8x128xbf16, #tpu.memory_space<vmem>>, %arg2: memref<32x8xbf16, #tpu.memory_space<vmem>>, %arg3: memref<32x1xf32, #tpu.memory_space<vmem>>, %arg4: memref<64x32xbf16, #tpu.memory_space<vmem>>, %arg5: memref<64x1xf32, #tpu.memory_space<vmem>>, %arg6: memref<32x64xbf16, #tpu.memory_space<vmem>>, %arg7: memref<32x1xf32, #tpu.memory_space<vmem>>, %arg8: memref<8x32xbf16, #tpu.memory_space<vmem>>, %arg9: memref<8x1xf32, #tpu.memory_space<vmem>>, %arg10: memref<8x128xf32, #tpu.memory_space<vmem>>) attributes {dimension_semantics = [#tpu.dimension_semantics<parallel>], iteration_bounds = array<i64: 1>, scalar_prefetch = 0 : i64, scratch_operands = 0 : i64, tpu.core_type = #tpu.core_type<tc>, window_params = [{transform_indices = @transform_0, window_bounds = array<i64: 8, 128>}, {pipeline_mode = #tpu.pipeline_mode<synchronous>, transform_indices = @transform_1, window_bounds = array<i64: 32, 8>}, {pipeline_mode = #tpu.pipeline_mode<synchronous>, transform_indices = @transform_2, window_bounds = array<i64: 32, 1>}, {pipeline_mode = #tpu.pipeline_mode<synchronous>, transform_indices = @transform_3, window_bounds = array<i64: 64, 32>}, {pipeline_mode = #tpu.pipeline_mode<synchronous>, transform_indices = @transform_4, window_bounds = array<i64: 64, 1>}, {pipeline_mode = #tpu.pipeline_mode<synchronous>, transform_indices = @transform_5, window_bounds = array<i64: 32, 64>}, {pipeline_mode = #tpu.pipeline_mode<synchronous>, transform_indices = @transform_6, window_bounds = array<i64: 32, 1>}, {pipeline_mode = #tpu.pipeline_mode<synchronous>, transform_indices = @transform_7, window_bounds = array<i64: 8, 32>}, {pipeline_mode = #tpu.pipeline_mode<synchronous>, transform_indices = @transform_8, window_bounds = array<i64: 8, 1>}, {transform_indices = @transform_9, window_bounds = array<i64: 8, 128>}]} {
    %c0 = arith.constant 0 : index
    %c0_0 = arith.constant 0 : index
    %0 = vector.load %arg2[%c0, %c0_0] : memref<32x8xbf16, #tpu.memory_space<vmem>>, vector<32x8xbf16>
    %c0_1 = arith.constant 0 : index
    %c0_2 = arith.constant 0 : index
    %1 = vector.load %arg3[%c0_1, %c0_2] : memref<32x1xf32, #tpu.memory_space<vmem>>, vector<32x1xf32>
    %c0_3 = arith.constant 0 : index
    %c0_4 = arith.constant 0 : index
    %2 = vector.load %arg4[%c0_3, %c0_4] : memref<64x32xbf16, #tpu.memory_space<vmem>>, vector<64x32xbf16>
    %c0_5 = arith.constant 0 : index
    %c0_6 = arith.constant 0 : index
    %3 = vector.load %arg5[%c0_5, %c0_6] : memref<64x1xf32, #tpu.memory_space<vmem>>, vector<64x1xf32>
    %c0_7 = arith.constant 0 : index
    %c0_8 = arith.constant 0 : index
    %4 = vector.load %arg6[%c0_7, %c0_8] : memref<32x64xbf16, #tpu.memory_space<vmem>>, vector<32x64xbf16>
    %c0_9 = arith.constant 0 : index
    %c0_10 = arith.constant 0 : index
    %5 = vector.load %arg7[%c0_9, %c0_10] : memref<32x1xf32, #tpu.memory_space<vmem>>, vector<32x1xf32>
    %c0_11 = arith.constant 0 : index
    %c0_12 = arith.constant 0 : index
    %6 = vector.load %arg8[%c0_11, %c0_12] : memref<8x32xbf16, #tpu.memory_space<vmem>>, vector<8x32xbf16>
    %c0_13 = arith.constant 0 : index
    %c0_14 = arith.constant 0 : index
    %7 = vector.load %arg9[%c0_13, %c0_14] : memref<8x1xf32, #tpu.memory_space<vmem>>, vector<8x1xf32>
    %c0_15 = arith.constant 0 : index
    %c0_16 = arith.constant 0 : index
    %8 = vector.load %arg1[%c0_15, %c0_16] : memref<8x128xbf16, #tpu.memory_space<vmem>>, vector<8x128xbf16>
    %cst = arith.constant dense<0.000000e+00> : vector<32x128xf32>
    %9 = tpu.matmul %0, %8, %cst {dimension_numbers = #tpu.dot_dimension_numbers<[1], [0], [0], [1], [0, 0, 1, 1], [], []>} : vector<32x8xbf16>, vector<8x128xbf16>, vector<32x128xf32> -> vector<32x128xf32>
    %10 = vector.broadcast %1 : vector<32x1xf32> to vector<32x128xf32>
    %11 = arith.addf %9, %10 : vector<32x128xf32>
    %cst_17 = arith.constant 0.000000e+00 : f32
    %12 = vector.broadcast %cst_17 : f32 to vector<32x128xf32>
    %13 = arith.cmpf ogt, %11, %12 : vector<32x128xf32>
    %cst_18 = arith.constant 0.00999999977 : f32
    %14 = vector.broadcast %cst_18 : f32 to vector<32x128xf32>
    %15 = arith.mulf %14, %11 : vector<32x128xf32>
    %16 = arith.select %13, %11, %15 : vector<32x128xi1>, vector<32x128xf32>
    %17 = arith.truncf %16 : vector<32x128xf32> to vector<32x128xbf16>
    %cst_19 = arith.constant dense<0.000000e+00> : vector<64x128xf32>
    %18 = tpu.matmul %2, %17, %cst_19 {dimension_numbers = #tpu.dot_dimension_numbers<[1], [0], [0], [1], [0, 0, 1, 1], [], []>} : vector<64x32xbf16>, vector<32x128xbf16>, vector<64x128xf32> -> vector<64x128xf32>
    %19 = vector.broadcast %3 : vector<64x1xf32> to vector<64x128xf32>
    %20 = arith.addf %18, %19 : vector<64x128xf32>
    %cst_20 = arith.constant 0.000000e+00 : f32
    %21 = vector.broadcast %cst_20 : f32 to vector<64x128xf32>
    %22 = arith.cmpf ogt, %20, %21 : vector<64x128xf32>
    %cst_21 = arith.constant 0.00999999977 : f32
    %23 = vector.broadcast %cst_21 : f32 to vector<64x128xf32>
    %24 = arith.mulf %23, %20 : vector<64x128xf32>
    %25 = arith.select %22, %20, %24 : vector<64x128xi1>, vector<64x128xf32>
    %26 = arith.truncf %25 : vector<64x128xf32> to vector<64x128xbf16>
    %cst_22 = arith.constant dense<0.000000e+00> : vector<32x128xf32>
    %27 = tpu.matmul %4, %26, %cst_22 {dimension_numbers = #tpu.dot_dimension_numbers<[1], [0], [0], [1], [0, 0, 1, 1], [], []>} : vector<32x64xbf16>, vector<64x128xbf16>, vector<32x128xf32> -> vector<32x128xf32>
    %28 = vector.broadcast %5 : vector<32x1xf32> to vector<32x128xf32>
    %29 = arith.addf %27, %28 : vector<32x128xf32>
    %cst_23 = arith.constant 0.000000e+00 : f32
    %30 = vector.broadcast %cst_23 : f32 to vector<32x128xf32>
    %31 = arith.cmpf ogt, %29, %30 : vector<32x128xf32>
    %cst_24 = arith.constant 0.00999999977 : f32
    %32 = vector.broadcast %cst_24 : f32 to vector<32x128xf32>
    %33 = arith.mulf %32, %29 : vector<32x128xf32>
    %34 = arith.select %31, %29, %33 : vector<32x128xi1>, vector<32x128xf32>
    %35 = arith.truncf %34 : vector<32x128xf32> to vector<32x128xbf16>
    %cst_25 = arith.constant dense<0.000000e+00> : vector<8x128xf32>
    %36 = tpu.matmul %6, %35, %cst_25 {dimension_numbers = #tpu.dot_dimension_numbers<[1], [0], [0], [1], [0, 0, 1, 1], [], []>} : vector<8x32xbf16>, vector<32x128xbf16>, vector<8x128xf32> -> vector<8x128xf32>
    %37 = vector.broadcast %7 : vector<8x1xf32> to vector<8x128xf32>
    %38 = arith.addf %36, %37 : vector<8x128xf32>
    %c0_26 = arith.constant 0 : index
    %c0_27 = arith.constant 0 : index
    %39 = vector.load %arg10[%c0_26, %c0_27] : memref<8x128xf32, #tpu.memory_space<vmem>>, vector<8x128xf32>
    tpu.vector_store %arg10[%c0_26, %c0_27], %38 {strides = array<i32>} : memref<8x128xf32, #tpu.memory_space<vmem>>, vector<8x128xf32>,
    return
  }
  func.func @transform_0(%arg0: i32) -> (i32, i32) {
    %c0_i32 = arith.constant 0 : i32
    %c0_i32_0 = arith.constant 0 : i32
    return %c0_i32, %arg0 : i32, i32
  }
  func.func @transform_1(%arg0: i32) -> (i32, i32) {
    %c0_i32 = arith.constant 0 : i32
    %c0_i32_0 = arith.constant 0 : i32
    %c0_i32_1 = arith.constant 0 : i32
    return %c0_i32, %c0_i32_0 : i32, i32
  }
  func.func @transform_2(%arg0: i32) -> (i32, i32) {
    %c0_i32 = arith.constant 0 : i32
    %c0_i32_0 = arith.constant 0 : i32
    %c0_i32_1 = arith.constant 0 : i32
    return %c0_i32, %c0_i32_0 : i32, i32
  }
  func.func @transform_3(%arg0: i32) -> (i32, i32) {
    %c0_i32 = arith.constant 0 : i32
    %c0_i32_0 = arith.constant 0 : i32
    %c0_i32_1 = arith.constant 0 : i32
    return %c0_i32, %c0_i32_0 : i32, i32
  }
  func.func @transform_4(%arg0: i32) -> (i32, i32) {
    %c0_i32 = arith.constant 0 : i32
    %c0_i32_0 = arith.constant 0 : i32
    %c0_i32_1 = arith.constant 0 : i32
    return %c0_i32, %c0_i32_0 : i32, i32
  }
  func.func @transform_5(%arg0: i32) -> (i32, i32) {
    %c0_i32 = arith.constant 0 : i32
    %c0_i32_0 = arith.constant 0 : i32
    %c0_i32_1 = arith.constant 0 : i32
    return %c0_i32, %c0_i32_0 : i32, i32
  }
  func.func @transform_6(%arg0: i32) -> (i32, i32) {
    %c0_i32 = arith.constant 0 : i32
    %c0_i32_0 = arith.constant 0 : i32
    %c0_i32_1 = arith.constant 0 : i32
    return %c0_i32, %c0_i32_0 : i32, i32
  }
  func.func @transform_7(%arg0: i32) -> (i32, i32) {
    %c0_i32 = arith.constant 0 : i32
    %c0_i32_0 = arith.constant 0 : i32
    %c0_i32_1 = arith.constant 0 : i32
    return %c0_i32, %c0_i32_0 : i32, i32
  }
  func.func @transform_8(%arg0: i32) -> (i32, i32) {
    %c0_i32 = arith.constant 0 : i32
    %c0_i32_0 = arith.constant 0 : i32
    %c0_i32_1 = arith.constant 0 : i32
    return %c0_i32, %c0_i32_0 : i32, i32
  }
  func.func @transform_9(%arg0: i32) -> (i32, i32) {
    %c0_i32 = arith.constant 0 : i32
    %c0_i32_0 = arith.constant 0 : i32
    return %c0_i32, %arg0 : i32, i32
  }
}

</mosaic_0001>

<llo_original>
// kernel: dqn_forward.1
$region0: #{dqn_forward.1}
  #allocation0 [shape = 'u32[]', space=smem, size = 0x4, offset = 0x4, fixed_abs, tag = 'smem constant byte address 0x4 - core index']
  #allocation1 [shape = 'u32[72,128]{1,0:T(1,128)}', space=vmem, size = 0x9000, scoped, tag = 'internal scratch']
  %s0 = inlined_call_operand.vmem [shape: bf16[8,128], index: 0, kind: input, shape index: {}]
  %s1 = inlined_call_operand.vmem [shape: bf16[32,8], index: 1, kind: input, shape index: {}]
  %s2 = inlined_call_operand.vmem [shape: f32[32,1], index: 2, kind: input, shape index: {}]
  %s3 = inlined_call_operand.vmem [shape: bf16[64,32], index: 3, kind: input, shape index: {}]
  %s4 = inlined_call_operand.vmem [shape: f32[64,1], index: 4, kind: input, shape index: {}]
  %s5 = inlined_call_operand.vmem [shape: bf16[32,64], index: 5, kind: input, shape index: {}]
  %s6 = inlined_call_operand.vmem [shape: f32[32,1], index: 6, kind: input, shape index: {}]
  %s7 = inlined_call_operand.vmem [shape: bf16[8,32], index: 7, kind: input, shape index: {}]
  %s8 = inlined_call_operand.vmem [shape: f32[8,1], index: 8, kind: input, shape index: {}]
  %s9 = inlined_call_operand.vmem [shape: f32[8,128], index: 9, kind: output, shape index: {}]
  %s10 = sld [smem:[#allocation0]]
  $region46: #{dqn_forward.1} parent=0
    _
  %s12 = ssub.s32 1, %s10
  %s13 = scalar_select 0, %s12, %s10
  // Predicated region
  $region2: #{dqn_forward.1} parent=0 // pred_check
    _
  $region3: #{dqn_forward.1} parent=0 // pred_check_branch
    %15 = sbr.rel (0) target = $region5
  $region4: #{dqn_forward.1} parent=0 // pred_region
    _
  $region5: #{dqn_forward.1} parent=0 // pred_fallthru
    _
  // Predicated region
  $region6: #{dqn_forward.1} parent=0 // pred_check
    _
  $region7: #{dqn_forward.1} parent=0 // pred_check_branch
    %17 = sbr.rel (0) target = $region9
  $region8: #{dqn_forward.1} parent=0 // pred_region
    _
  $region9: #{dqn_forward.1} parent=0 // pred_fallthru
    _
  // Predicated region
  $region10: #{dqn_forward.1} parent=0 // pred_check
    _
  $region11: #{dqn_forward.1} parent=0 // pred_check_branch
    %19 = sbr.rel (0) target = $region13
  $region12: #{dqn_forward.1} parent=0 // pred_region
    _
  $region13: #{dqn_forward.1} parent=0 // pred_fallthru
    _
  // Predicated region
  $region14: #{dqn_forward.1} parent=0 // pred_check
    _
  $region15: #{dqn_forward.1} parent=0 // pred_check_branch
    %21 = sbr.rel (0) target = $region17
  $region16: #{dqn_forward.1} parent=0 // pred_region
    _
  $region17: #{dqn_forward.1} parent=0 // pred_fallthru
    _
  // Predicated region
  $region18: #{dqn_forward.1} parent=0 // pred_check
    _
  $region19: #{dqn_forward.1} parent=0 // pred_check_branch
    %23 = sbr.rel (0) target = $region21
  $region20: #{dqn_forward.1} parent=0 // pred_region
    _
  $region21: #{dqn_forward.1} parent=0 // pred_fallthru
    _
  // Predicated region
  $region22: #{dqn_forward.1} parent=0 // pred_check
    _
  $region23: #{dqn_forward.1} parent=0 // pred_check_branch
    %25 = sbr.rel (0) target = $region25
  $region24: #{dqn_forward.1} parent=0 // pred_region
    _
  $region25: #{dqn_forward.1} parent=0 // pred_fallthru
    _
  // Predicated region
  $region26: #{dqn_forward.1} parent=0 // pred_check
    _
  $region27: #{dqn_forward.1} parent=0 // pred_check_branch
    %27 = sbr.rel (0) target = $region29
  $region28: #{dqn_forward.1} parent=0 // pred_region
    _
  $region29: #{dqn_forward.1} parent=0 // pred_fallthru
    _
  // Predicated region
  $region30: #{dqn_forward.1} parent=0 // pred_check
    _
  $region31: #{dqn_forward.1} parent=0 // pred_check_branch
    %29 = sbr.rel (0) target = $region33
  $region32: #{dqn_forward.1} parent=0 // pred_region
    _
  $region33: #{dqn_forward.1} parent=0 // pred_fallthru
    _
  // Predicated region
  $region34: #{dqn_forward.1} parent=0 // pred_check
    _
  $region35: #{dqn_forward.1} parent=0 // pred_check_branch
    %31 = sbr.rel (0) target = $region37
  $region36: #{dqn_forward.1} parent=0 // pred_region
    _
  $region37: #{dqn_forward.1} parent=0 // pred_fallthru
    _
  %v33 = vld [vmem:[%s1] sm:$0xf]
  %v34 = vld [vmem:[%s1 + $0x4] sm:$0xf]
  %v35 = vld [vmem:[%s1 + $0x8] sm:$0xf]
  %v36 = vld [vmem:[%s1 + $0xc] sm:$0xf]
  %v37 = vld [vmem:[%s2] sm:$0xff]
  %v38 = vld [vmem:[%s2 + $0x8] sm:$0xff]
  %v39 = vld [vmem:[%s2 + $0x10] sm:$0xff]
  %v40 = vld [vmem:[%s2 + $0x18] sm:$0xff]
  %v41 = vld [vmem:[%s3] sm:$0xf]
  %v42 = vld [vmem:[%s3 + $0x4] sm:$0xf]
  %v43 = vld [vmem:[%s3 + $0x8] sm:$0xf]
  %v44 = vld [vmem:[%s3 + $0xc] sm:$0xf]
  %v45 = vld [vmem:[%s3 + $0x10] sm:$0xf]
  %v46 = vld [vmem:[%s3 + $0x14] sm:$0xf]
  %v47 = vld [vmem:[%s3 + $0x18] sm:$0xf]
  %v48 = vld [vmem:[%s3 + $0x1c] sm:$0xf]
  %v49 = vld [vmem:[%s4] sm:$0xff]
  %v50 = vld [vmem:[%s4 + $0x8] sm:$0xff]
  %v51 = vld [vmem:[%s4 + $0x10] sm:$0xff]
  %v52 = vld [vmem:[%s4 + $0x18] sm:$0xff]
  %v53 = vld [vmem:[%s4 + $0x20] sm:$0xff]
  %v54 = vld [vmem:[%s4 + $0x28] sm:$0xff]
  %v55 = vld [vmem:[%s4 + $0x30] sm:$0xff]
  %v56 = vld [vmem:[%s4 + $0x38] sm:$0xff]
  %v57 = vld [vmem:[%s5] sm:$0xf]
  %v58 = vld [vmem:[%s5 + $0x4] sm:$0xf]
  %v59 = vld [vmem:[%s5 + $0x8] sm:$0xf]
  %v60 = vld [vmem:[%s5 + $0xc] sm:$0xf]
  %v61 = vld [vmem:[%s6] sm:$0xff]
  %v62 = vld [vmem:[%s6 + $0x8] sm:$0xff]
  %v63 = vld [vmem:[%s6 + $0x10] sm:$0xff]
  %v64 = vld [vmem:[%s6 + $0x18] sm:$0xff]
  %v65 = vld [vmem:[%s7] sm:$0xf]
  %v66 = vld [vmem:[%s8] sm:$0xff]
  %v67 = vld [vmem:[%s0] sm:$0xf]
  %69 = vset.pattern.permute.xlu0 0
  %70 = vperm.xlu0 %69, %v37
  %v71 = vpop.permute.xlu0 %70
  %74 = vset.pattern.permute.xlu0 0
  %75 = vperm.xlu0 %74, %v38
  %v76 = vpop.permute.xlu0 %75
  %79 = vset.pattern.permute.xlu0 0
  %80 = vperm.xlu0 %79, %v39
  %v81 = vpop.permute.xlu0 %80
  %84 = vset.pattern.permute.xlu0 0
  %85 = vperm.xlu0 %84, %v40
  %v86 = vpop.permute.xlu0 %85
  %v92 = vunpack.c.l.b16 %v33
  %v93 = vunpack.c.l.b16 %v34
  %v94 = vunpack.c.l.b16 %v35
  %v95 = vunpack.c.l.b16 %v36
  %v96 = vpack.c.b16 %v93, %v92
  %v97 = vpack.c.b16 %v95, %v94
  %vm98 = vcmask 64512
  %v100 = vsel %vm98, %v96, 0
  %v103 = vsel %vm98, %v97, 0
  %vm105 = vcmask 1043456
  %v107 = vsel %vm105, %v67, 0
  %109 = vmatpush.bf16.msra.mxu0 0
  %110 = vmatpush.bf16.msra.mxu0 0
  %111 = vmatpush.bf16.msra.mxu0 0
  %112 = vmatpush.bf16.msra.mxu0 0
  %113 = vmatpush.bf16.msra.mxu0 0
  %114 = vmatpush.bf16.msra.mxu0 0
  %115 = vmatpush.bf16.msra.mxu0 0
  %116 = vmatpush.bf16.msra.mxu0 %v107
  %117 = vmatmul.bf16.gmra.mxu0 %v100
  %v118 = vpop.f32.mrf.mxu0
  %v119 = vadd.f32 %v71, %v118
  %v120 = vpop.f32.mrf.mxu0
  %v121 = vadd.f32 %v76, %v120
  %122 = vmatmul.bf16.gmra.mxu0 %v103
  %v123 = vpop.f32.mrf.mxu0
  %v124 = vadd.f32 %v81, %v123
  %v125 = vpop.f32.mrf.mxu0
  %v126 = vadd.f32 %v86, %v125
  %127 = vdwg.mxu0
  %vm128 = vcmp.gt.f32.partialorder %v119, 0.0
  %vm129 = vcmp.gt.f32.partialorder %v121, 0.0
  %vm130 = vcmp.gt.f32.partialorder %v124, 0.0
  %vm131 = vcmp.gt.f32.partialorder %v126, 0.0
  %v132 = vmul.f32 %v119, 0.01
  %v133 = vmul.f32 %v121, 0.01
  %v134 = vmul.f32 %v124, 0.01
  %v135 = vmul.f32 %v126, 0.01
  %v136 = vsel %vm128, %v119, %v132
  %v137 = vsel %vm129, %v121, %v133
  %v138 = vsel %vm130, %v124, %v134
  %v139 = vsel %vm131, %v126, %v135
  %v140 = vpack.c.bf16 %v137, %v136
  %v141 = vpack.c.bf16 %v139, %v138
  %143 = vset.pattern.permute.xlu0 0
  %144 = vperm.xlu0 %143, %v49
  %v145 = vpop.permute.xlu0 %144
  %148 = vset.pattern.permute.xlu0 0
  %149 = vperm.xlu0 %148, %v50
  %v150 = vpop.permute.xlu0 %149
  %153 = vset.pattern.permute.xlu0 0
  %154 = vperm.xlu0 %153, %v51
  %v155 = vpop.permute.xlu0 %154
  %158 = vset.pattern.permute.xlu0 0
  %159 = vperm.xlu0 %158, %v52
  %v160 = vpop.permute.xlu0 %159
  %163 = vset.pattern.permute.xlu0 0
  %164 = vperm.xlu0 %163, %v53
  %v165 = vpop.permute.xlu0 %164
  %168 = vset.pattern.permute.xlu0 0
  %169 = vperm.xlu0 %168, %v54
  %v170 = vpop.permute.xlu0 %169
  %173 = vset.pattern.permute.xlu0 0
  %174 = vperm.xlu0 %173, %v55
  %v175 = vpop.permute.xlu0 %174
  %178 = vset.pattern.permute.xlu0 0
  %179 = vperm.xlu0 %178, %v56
  %v180 = vpop.permute.xlu0 %179
  %v190 = vunpack.c.l.b16 %v41
  %v191 = vunpack.c.l.b16 %v42
  %v192 = vunpack.c.l.b16 %v43
  %v193 = vunpack.c.l.b16 %v44
  %v194 = vunpack.c.l.b16 %v45
  %v195 = vunpack.c.l.b16 %v46
  %v196 = vunpack.c.l.b16 %v47
  %v197 = vunpack.c.l.b16 %v48
  %v198 = vpack.c.b16 %v191, %v190
  %v199 = vpack.c.b16 %v193, %v192
  %v200 = vpack.c.b16 %v195, %v194
  %v201 = vpack.c.b16 %v197, %v196
  %vm202 = vcmask 261120
  %v204 = vsel %vm202, %v198, 0
  %v207 = vsel %vm202, %v199, 0
  %v210 = vsel %vm202, %v200, 0
  %v213 = vsel %vm202, %v201, 0
  %215 = vmatpush.bf16.msra.mxu0 0
  %216 = vmatpush.bf16.msra.mxu0 0
  %217 = vmatpush.bf16.msra.mxu0 0
  %218 = vmatpush.bf16.msra.mxu0 0
  %219 = vmatpush.bf16.msra.mxu0 0
  %220 = vmatpush.bf16.msra.mxu0 0
  %221 = vmatpush.bf16.msra.mxu0 %v141
  %222 = vmatpush.bf16.msra.mxu0 %v140
  %223 = vmatmul.bf16.gmra.mxu0 %v204
  %v224 = vpop.f32.mrf.mxu0
  %v225 = vadd.f32 %v145, %v224
  %v226 = vpop.f32.mrf.mxu0
  %v227 = vadd.f32 %v150, %v226
  %228 = vmatmul.bf16.gmra.mxu0 %v207
  %v229 = vpop.f32.mrf.mxu0
  %v230 = vadd.f32 %v155, %v229
  %v231 = vpop.f32.mrf.mxu0
  %v232 = vadd.f32 %v160, %v231
  %233 = vmatmul.bf16.gmra.mxu0 %v210
  %v234 = vpop.f32.mrf.mxu0
  %v235 = vadd.f32 %v165, %v234
  %v236 = vpop.f32.mrf.mxu0
  %v237 = vadd.f32 %v170, %v236
  %238 = vmatmul.bf16.gmra.mxu0 %v213
  %v239 = vpop.f32.mrf.mxu0
  %v240 = vadd.f32 %v175, %v239
  %v241 = vpop.f32.mrf.mxu0
  %v242 = vadd.f32 %v180, %v241
  %243 = vdwg.mxu0
  %vm244 = vcmp.gt.f32.partialorder %v225, 0.0
  %vm245 = vcmp.gt.f32.partialorder %v227, 0.0
  %vm246 = vcmp.gt.f32.partialorder %v230, 0.0
  %vm247 = vcmp.gt.f32.partialorder %v232, 0.0
  %vm248 = vcmp.gt.f32.partialorder %v235, 0.0
  %vm249 = vcmp.gt.f32.partialorder %v237, 0.0
  %vm250 = vcmp.gt.f32.partialorder %v240, 0.0
  %vm251 = vcmp.gt.f32.partialorder %v242, 0.0
  %v252 = vmul.f32 %v225, 0.01
  %v253 = vmul.f32 %v227, 0.01
  %v254 = vmul.f32 %v230, 0.01
  %v255 = vmul.f32 %v232, 0.01
  %v256 = vmul.f32 %v235, 0.01
  %v257 = vmul.f32 %v237, 0.01
  %v258 = vmul.f32 %v240, 0.01
  %v259 = vmul.f32 %v242, 0.01
  %v260 = vsel %vm244, %v225, %v252
  %v261 = vsel %vm245, %v227, %v253
  %v262 = vsel %vm246, %v230, %v254
  %v263 = vsel %vm247, %v232, %v255
  %v264 = vsel %vm248, %v235, %v256
  %v265 = vsel %vm249, %v237, %v257
  %v266 = vsel %vm250, %v240, %v258
  %v267 = vsel %vm251, %v242, %v259
  %v268 = vpack.c.bf16 %v261, %v260
  %v269 = vpack.c.bf16 %v263, %v262
  %v270 = vpack.c.bf16 %v265, %v264
  %v271 = vpack.c.bf16 %v267, %v266
  %273 = vset.pattern.permute.xlu0 0
  %274 = vperm.xlu0 %273, %v61
  %v275 = vpop.permute.xlu0 %274
  %278 = vset.pattern.permute.xlu0 0
  %279 = vperm.xlu0 %278, %v62
  %v280 = vpop.permute.xlu0 %279
  %283 = vset.pattern.permute.xlu0 0
  %284 = vperm.xlu0 %283, %v63
  %v285 = vpop.permute.xlu0 %284
  %288 = vset.pattern.permute.xlu0 0
  %289 = vperm.xlu0 %288, %v64
  %v290 = vpop.permute.xlu0 %289
  %v296 = vunpack.c.l.b16 %v57
  %v297 = vunpack.c.l.b16 %v58
  %v298 = vunpack.c.l.b16 %v59
  %v299 = vunpack.c.l.b16 %v60
  %v300 = vpack.c.b16 %v297, %v296
  %v301 = vpack.c.b16 %v299, %v298
  %vm302 = vcmask 523264
  %v304 = vsel %vm302, %v300, 0
  %v307 = vsel %vm302, %v301, 0
  %309 = vmatpush.bf16.msra.mxu0 0
  %310 = vmatpush.bf16.msra.mxu0 0
  %311 = vmatpush.bf16.msra.mxu0 0
  %312 = vmatpush.bf16.msra.mxu0 0
  %313 = vmatpush.bf16.msra.mxu0 %v271
  %314 = vmatpush.bf16.msra.mxu0 %v270
  %315 = vmatpush.bf16.msra.mxu0 %v269
  %316 = vmatpush.bf16.msra.mxu0 %v268
  %317 = vmatmul.bf16.gmra.mxu0 %v304
  %v318 = vpop.f32.mrf.mxu0
  %v319 = vadd.f32 %v275, %v318
  %v320 = vpop.f32.mrf.mxu0
  %v321 = vadd.f32 %v280, %v320
  %322 = vmatmul.bf16.gmra.mxu0 %v307
  %v323 = vpop.f32.mrf.mxu0
  %v324 = vadd.f32 %v285, %v323
  %v325 = vpop.f32.mrf.mxu0
  %v326 = vadd.f32 %v290, %v325
  %327 = vdwg.mxu0
  %vm328 = vcmp.gt.f32.partialorder %v319, 0.0
  %vm329 = vcmp.gt.f32.partialorder %v321, 0.0
  %vm330 = vcmp.gt.f32.partialorder %v324, 0.0
  %vm331 = vcmp.gt.f32.partialorder %v326, 0.0
  %v332 = vmul.f32 %v319, 0.01
  %v333 = vmul.f32 %v321, 0.01
  %v334 = vmul.f32 %v324, 0.01
  %v335 = vmul.f32 %v326, 0.01
  %v336 = vsel %vm328, %v319, %v332
  %v337 = vsel %vm329, %v321, %v333
  %v338 = vsel %vm330, %v324, %v334
  %v339 = vsel %vm331, %v326, %v335
  %v340 = vpack.c.bf16 %v337, %v336
  %v341 = vpack.c.bf16 %v339, %v338
  %343 = vset.pattern.permute.xlu0 0
  %344 = vperm.xlu0 %343, %v66
  %v345 = vpop.permute.xlu0 %344
  %v348 = vsel %vm202, %v65, 0
  %350 = vmatpush.bf16.msra.mxu0 0
  %351 = vmatpush.bf16.msra.mxu0 0
  %352 = vmatpush.bf16.msra.mxu0 0
  %353 = vmatpush.bf16.msra.mxu0 0
  %354 = vmatpush.bf16.msra.mxu0 0
  %355 = vmatpush.bf16.msra.mxu0 0
  %356 = vmatpush.bf16.msra.mxu0 %v341
  %357 = vmatpush.bf16.msra.mxu0 %v340
  %358 = vmatmul.bf16.gmra.mxu0 %v348
  %v359 = vpop.f32.mrf.mxu0
  %v360 = vadd.f32 %v345, %v359
  %v361 = vpop.f32.mrf.mxu0
  %362 = vdwg.mxu0
  %363 = vst [vmem:[%s9] sm:$0xff] %v360
  // Predicated region
  $region38: #{dqn_forward.1} parent=0 // pred_check
    _
  $region39: #{dqn_forward.1} parent=0 // pred_check_branch
    %365 = sbr.rel (0) target = $region41
  $region40: #{dqn_forward.1} parent=0 // pred_region
    _
  $region41: #{dqn_forward.1} parent=0 // pred_fallthru
    _
  // Predicated region
  $region42: #{dqn_forward.1} parent=0 // pred_check
    _
  $region43: #{dqn_forward.1} parent=0 // pred_check_branch
    %367 = sbr.rel (0) target = $region45
  $region44: #{dqn_forward.1} parent=0 // pred_region
    _
  $region45: #{dqn_forward.1} parent=0 // pred_fallthru
    _

</llo_original>
